<compile_context>
chip_gen: v5e
topology: v5e:2x2
jax: 0.10.0
libtpu: 0.0.40
codegen_flags: <defaults>
</compile_context>

<pallas_src>
import jax
import jax.numpy as jnp
from jax.experimental import pallas as pl
from jax.experimental.pallas import tpu as pltpu


def _rbf_kernel(x_ref, xsq_ref, c_ref, csq_ref, isig2_ref, o_ref):
    # x_ref:    (TB, I)    xsq_ref:  (TB, 1)
    # c_ref:    (I, TO)    csq_ref:  (1, TO)   isig2_ref: (1, TO)
    # o_ref:    (TB, TO)
    xc = jnp.dot(x_ref[...], c_ref[...], preferred_element_type=jnp.float32)  # MXU
    d2 = jnp.maximum(xsq_ref[...] + csq_ref[...] - 2.0 * xc, 0.0)             # (TB, TO)
    # Gaussian basis with sigma folded in: exp(-(d/sigma)^2) = exp(-d2 * sigma^-2)
    o_ref[...] = jnp.exp(-d2 * isig2_ref[...]).astype(o_ref.dtype)


def _round_up(n, m):
    return ((n + m - 1) // m) * m


def rbf_layer(x, centers, log_sigmas, *, tb=512, to=1024):
    """Pallas RBF layer forward.

    x:          (B, input_features) or (B, 1, input_features)
    centers:    (input_features, output_features)
    log_sigmas: (output_features,)
    returns:    (B, output_features) float32
    """
    if x.ndim == 3 and x.shape[1] == 1:      # mirrors X.squeeze(1)
        x = x[:, 0, :]
    x = x.astype(jnp.float32)
    centers = centers.astype(jnp.float32)
    log_sigmas = log_sigmas.astype(jnp.float32)

    B, I = x.shape
    I2, O = centers.shape
    assert I == I2, "input_features mismatch"

    # Adaptive tile sizes (multiples of 8 / 128), capped so the double-buffered
    # f32 output tile stays well inside v7x's scoped VMEM.
    tb = min(tb, _round_up(B, 8))
    to = min(to, _round_up(O, 128))
    Bp = _round_up(B, tb)
    Op = _round_up(O, to)

    # Hoisted constants (plain JAX, tiny vectors; computed once, not per tile).
    x_sq = jnp.sum(x * x, axis=1, keepdims=True)                    # (B, 1)
    c_sq = jnp.sum(centers * centers, axis=0, keepdims=True)        # (1, O)
    inv_sig2 = jnp.exp(-2.0 * log_sigmas).reshape(1, O)             # (1, O)

    # Pad tails so the grid tiles evenly; padded rows/cols are sliced off below.
    if Bp != B:
        x = jnp.pad(x, ((0, Bp - B), (0, 0)))
        x_sq = jnp.pad(x_sq, ((0, Bp - B), (0, 0)))
    if Op != O:
        centers = jnp.pad(centers, ((0, 0), (0, Op - O)))
        c_sq = jnp.pad(c_sq, ((0, 0), (0, Op - O)))
        inv_sig2 = jnp.pad(inv_sig2, ((0, 0), (0, Op - O)))

    grid = (Bp // tb, Op // to)
    out = pl.pallas_call(
        _rbf_kernel,
        out_shape=jax.ShapeDtypeStruct((Bp, Op), jnp.float32),
        grid_spec=pltpu.PrefetchScalarGridSpec(
            num_scalar_prefetch=0,
            grid=grid,
            in_specs=[
                pl.BlockSpec((tb, I), lambda i, j: (i, 0)),   # X tile (full feature dim)
                pl.BlockSpec((tb, 1), lambda i, j: (i, 0)),   # ||x||^2
                pl.BlockSpec((I, to), lambda i, j: (0, j)),   # centers tile
                pl.BlockSpec((1, to), lambda i, j: (0, j)),   # ||c||^2
                pl.BlockSpec((1, to), lambda i, j: (0, j)),   # exp(-2*log_sigma)
            ],
            out_specs=pl.BlockSpec((tb, to), lambda i, j: (i, j)),
        ),
        compiler_params=pltpu.CompilerParams(
            dimension_semantics=("parallel", "parallel"),
        ),
    )(x, x_sq, centers, c_sq, inv_sig2)

    if Bp != B or Op != O:
        out = out[:B, :O]
    return out


def _reference(x, centers, log_sigmas):
    # Pure-JAX reference with the direct-difference formulation.
    if x.ndim == 3 and x.shape[1] == 1:
        x = x[:, 0, :]
    diff = x[:, None, :] - centers.T[None, :, :]              # (B, O, I)
    dist = jnp.sqrt(jnp.sum(diff * diff, axis=-1))            # (B, O)
    r = dist / jnp.exp(log_sigmas)[None, :]
    return jnp.exp(-(r * r))                                  # Gaussian basis


if __name__ == "__main__":
    key = jax.random.PRNGKey(0)
    k_x, k_c, k_x2, k_c2 = jax.random.split(key, 4)

    # Case 1: small, tile-aligned shapes (as the module's forward implies).
    batch, input_features, output_features = 32, 8, 128
    x = jax.random.normal(k_x, (batch, 1, input_features), dtype=jnp.float32)
    centers = jax.random.normal(k_c, (input_features, output_features), dtype=jnp.float32)
    log_sigmas = jnp.zeros((output_features,), dtype=jnp.float32)   # reset_parameters()

    out = jax.block_until_ready(rbf_layer(x, centers, log_sigmas))
    ref = _reference(x, centers, log_sigmas)
    assert out.shape == (batch, output_features)
    assert jnp.allclose(out, ref, rtol=1e-4, atol=1e-5), "mismatch vs reference (aligned)"

    # Case 2: ragged shapes exercising the padded-tail path.
    b2, o2 = 37, 200
    x2 = jax.random.normal(k_x2, (b2, 1, input_features), dtype=jnp.float32)
    centers2 = jax.random.normal(k_c2, (input_features, o2), dtype=jnp.float32)
    log_sigmas2 = 0.1 * jnp.ones((o2,), dtype=jnp.float32)

    out2 = jax.block_until_ready(rbf_layer(x2, centers2, log_sigmas2))
    ref2 = _reference(x2, centers2, log_sigmas2)
    assert out2.shape == (b2, o2)
    assert jnp.allclose(out2, ref2, rtol=1e-4, atol=1e-5), "mismatch vs reference (ragged)"

    print("KERNEL_OK")
</pallas_src>

<mosaic_0001>
module attributes {stable_mosaic.version = 11 : i64} {
  func.func @_rbf_kernel(%arg0: i32, %arg1: i32, %arg2: memref<32x8xf32, #tpu.memory_space<vmem>>, %arg3: memref<32x1xf32, #tpu.memory_space<vmem>>, %arg4: memref<8x128xf32, #tpu.memory_space<vmem>>, %arg5: memref<1x128xf32, #tpu.memory_space<vmem>>, %arg6: memref<1x128xf32, #tpu.memory_space<vmem>>, %arg7: memref<32x128xf32, #tpu.memory_space<vmem>>) attributes {dimension_semantics = [#tpu.dimension_semantics<parallel>, #tpu.dimension_semantics<parallel>], iteration_bounds = array<i64: 1, 1>, scalar_prefetch = 0 : i64, scratch_operands = 0 : i64, tpu.core_type = #tpu.core_type<tc>, window_params = [{transform_indices = @transform_0, window_bounds = array<i64: 32, 8>}, {transform_indices = @transform_1, window_bounds = array<i64: 32, 1>}, {transform_indices = @transform_2, window_bounds = array<i64: 8, 128>}, {transform_indices = @transform_3, window_bounds = array<i64: 1, 128>}, {transform_indices = @transform_4, window_bounds = array<i64: 1, 128>}, {transform_indices = @transform_5, window_bounds = array<i64: 32, 128>}]} {
    %c0 = arith.constant 0 : index
    %c0_0 = arith.constant 0 : index
    %0 = vector.load %arg2[%c0, %c0_0] : memref<32x8xf32, #tpu.memory_space<vmem>>, vector<32x8xf32>
    %c0_1 = arith.constant 0 : index
    %c0_2 = arith.constant 0 : index
    %1 = vector.load %arg4[%c0_1, %c0_2] : memref<8x128xf32, #tpu.memory_space<vmem>>, vector<8x128xf32>
    %cst = arith.constant dense<0.000000e+00> : vector<32x128xf32>
    %2 = tpu.matmul %0, %1, %cst {dimension_numbers = #tpu.dot_dimension_numbers<[1], [0], [0], [1], [0, 0, 1, 1], [], []>} : vector<32x8xf32>, vector<8x128xf32>, vector<32x128xf32> -> vector<32x128xf32>
    %c0_3 = arith.constant 0 : index
    %c0_4 = arith.constant 0 : index
    %3 = vector.load %arg3[%c0_3, %c0_4] : memref<32x1xf32, #tpu.memory_space<vmem>>, vector<32x1xf32>
    %c0_5 = arith.constant 0 : index
    %c0_6 = arith.constant 0 : index
    %4 = vector.load %arg5[%c0_5, %c0_6] : memref<1x128xf32, #tpu.memory_space<vmem>>, vector<1x128xf32>
    %5 = vector.broadcast %3 : vector<32x1xf32> to vector<32x128xf32>
    %6 = vector.broadcast %4 : vector<1x128xf32> to vector<32x128xf32>
    %7 = arith.addf %5, %6 : vector<32x128xf32>
    %cst_7 = arith.constant 2.000000e+00 : f32
    %8 = vector.broadcast %cst_7 : f32 to vector<32x128xf32>
    %9 = arith.mulf %8, %2 : vector<32x128xf32>
    %10 = arith.subf %7, %9 : vector<32x128xf32>
    %cst_8 = arith.constant 0.000000e+00 : f32
    %11 = vector.broadcast %cst_8 : f32 to vector<32x128xf32>
    %12 = arith.maximumf %10, %11 : vector<32x128xf32>
    %cst_9 = arith.constant 0.000000e+00 : f32
    %13 = vector.broadcast %cst_9 : f32 to vector<32x128xf32>
    %14 = arith.subf %13, %12 : vector<32x128xf32>
    %c0_10 = arith.constant 0 : index
    %c0_11 = arith.constant 0 : index
    %15 = vector.load %arg6[%c0_10, %c0_11] : memref<1x128xf32, #tpu.memory_space<vmem>>, vector<1x128xf32>
    %16 = vector.broadcast %15 : vector<1x128xf32> to vector<32x128xf32>
    %17 = arith.mulf %14, %16 : vector<32x128xf32>
    %18 = math.exp %17 : vector<32x128xf32>
    %c0_12 = arith.constant 0 : index
    %c0_13 = arith.constant 0 : index
    %19 = vector.load %arg7[%c0_12, %c0_13] : memref<32x128xf32, #tpu.memory_space<vmem>>, vector<32x128xf32>
    tpu.vector_store %arg7[%c0_12, %c0_13], %18 {strides = array<i32>} : memref<32x128xf32, #tpu.memory_space<vmem>>, vector<32x128xf32>,
    return
  }
  func.func @transform_0(%arg0: i32, %arg1: i32) -> (i32, i32) {
    %c0_i32 = arith.constant 0 : i32
    %c0_i32_0 = arith.constant 0 : i32
    return %arg0, %c0_i32 : i32, i32
  }
  func.func @transform_1(%arg0: i32, %arg1: i32) -> (i32, i32) {
    %c0_i32 = arith.constant 0 : i32
    %c0_i32_0 = arith.constant 0 : i32
    return %arg0, %c0_i32 : i32, i32
  }
  func.func @transform_2(%arg0: i32, %arg1: i32) -> (i32, i32) {
    %c0_i32 = arith.constant 0 : i32
    %c0_i32_0 = arith.constant 0 : i32
    return %c0_i32, %arg1 : i32, i32
  }
  func.func @transform_3(%arg0: i32, %arg1: i32) -> (i32, i32) {
    %c0_i32 = arith.constant 0 : i32
    %c0_i32_0 = arith.constant 0 : i32
    return %c0_i32, %arg1 : i32, i32
  }
  func.func @transform_4(%arg0: i32, %arg1: i32) -> (i32, i32) {
    %c0_i32 = arith.constant 0 : i32
    %c0_i32_0 = arith.constant 0 : i32
    return %c0_i32, %arg1 : i32, i32
  }
  func.func @transform_5(%arg0: i32, %arg1: i32) -> (i32, i32) {
    %c0_i32 = arith.constant 0 : i32
    return %arg0, %arg1 : i32, i32
  }
}

</mosaic_0001>

<llo_original>
// kernel: tpu_custom_call.1
$region0: #{tpu_custom_call.1}
  #allocation0 [shape = 'u32[]', space=smem, size = 0x4, offset = 0x4, fixed_abs, tag = 'smem constant byte address 0x4 - core index']
  #allocation1 [shape = 'u32[72,128]{1,0:T(1,128)}', space=vmem, size = 0x9000, scoped, tag = 'internal scratch']
  %s0 = inlined_call_operand.vmem [shape: f32[32,8], index: 0, kind: input, shape index: {}]
  %s1 = inlined_call_operand.vmem [shape: f32[32,1], index: 1, kind: input, shape index: {}]
  %s2 = inlined_call_operand.vmem [shape: f32[8,128], index: 2, kind: input, shape index: {}]
  %s3 = inlined_call_operand.vmem [shape: f32[1,128], index: 3, kind: input, shape index: {}]
  %s4 = inlined_call_operand.vmem [shape: f32[1,128], index: 4, kind: input, shape index: {}]
  %s5 = inlined_call_operand.hbm [shape: f32[32,128], index: 5, kind: output, shape index: {}]
  %s6 = sld [smem:[#allocation0]]
  $region30: #{tpu_custom_call.1} parent=0
    _
  %s8 = ssub.s32 1, %s6
  %s9 = scalar_select 0, %s8, %s6
  $region1: #{tpu_custom_call.1} parent=0
    #allocation2 [shape = 'u8[16384]{0}', space=vmem, size = 0x4000, scoped, tag = 'output window, operand 0, single buffered']
    #allocation3 [shape = 's32[1]{0}', space=sflag, size = 0x4, scoped, tag = 'scoped memory for tpu_custom_call.1']
    %10 = vsyncpa [#allocation3], 0
    // Predicated region
    $region2: #{tpu_custom_call.1} parent=1 // pred_check
      _
    $region3: #{tpu_custom_call.1} parent=1 // pred_check_branch
      %12 = sbr.rel (0) target = $region5
    $region4: #{tpu_custom_call.1} parent=1 // pred_region
      _
    $region5: #{tpu_custom_call.1} parent=1 // pred_fallthru
      _
    // Predicated region
    $region6: #{tpu_custom_call.1} parent=1 // pred_check
      _
    $region7: #{tpu_custom_call.1} parent=1 // pred_check_branch
      %14 = sbr.rel (0) target = $region9
    $region8: #{tpu_custom_call.1} parent=1 // pred_region
      _
    $region9: #{tpu_custom_call.1} parent=1 // pred_fallthru
      _
    // Predicated region
    $region10: #{tpu_custom_call.1} parent=1 // pred_check
      _
    $region11: #{tpu_custom_call.1} parent=1 // pred_check_branch
      %16 = sbr.rel (0) target = $region13
    $region12: #{tpu_custom_call.1} parent=1 // pred_region
      _
    $region13: #{tpu_custom_call.1} parent=1 // pred_fallthru
      _
    // Predicated region
    $region14: #{tpu_custom_call.1} parent=1 // pred_check
      _
    $region15: #{tpu_custom_call.1} parent=1 // pred_check_branch
      %18 = sbr.rel (0) target = $region17
    $region16: #{tpu_custom_call.1} parent=1 // pred_region
      _
    $region17: #{tpu_custom_call.1} parent=1 // pred_fallthru
      _
    // Predicated region
    $region18: #{tpu_custom_call.1} parent=1 // pred_check
      _
    $region19: #{tpu_custom_call.1} parent=1 // pred_check_branch
      %20 = sbr.rel (0) target = $region21
    $region20: #{tpu_custom_call.1} parent=1 // pred_region
      _
    $region21: #{tpu_custom_call.1} parent=1 // pred_fallthru
      _
    %v21 = vld [vmem:[%s0] sm:$0xff]
    %v22 = vld [vmem:[%s0 + $0x8] sm:$0xff]
    %v23 = vld [vmem:[%s0 + $0x10] sm:$0xff]
    %v24 = vld [vmem:[%s0 + $0x18] sm:$0xff]
    %v25 = vld [vmem:[%s2] sm:$0xff]
    %vm26 = vcmask 64512
    %v28 = vsel %vm26, %v21, 0
    %v31 = vsel %vm26, %v22, 0
    %v34 = vsel %vm26, %v23, 0
    %v37 = vsel %vm26, %v24, 0
    %39 = vmatpush.msra.mxu0 0.0
    %40 = vmatpush.msra.mxu0 0.0
    %41 = vmatpush.msra.mxu0 0.0
    %42 = vmatpush.msra.mxu0 0.0
    %43 = vmatpush.msra.mxu0 0.0
    %44 = vmatpush.msra.mxu0 0.0
    %45 = vmatpush.msra.mxu0 0.0
    %46 = vmatpush.msra.mxu0 0.0
    %47 = vmatpush.msra.mxu0 0.0
    %48 = vmatpush.msra.mxu0 0.0
    %49 = vmatpush.msra.mxu0 0.0
    %50 = vmatpush.msra.mxu0 0.0
    %51 = vmatpush.msra.mxu0 0.0
    %52 = vmatpush.msra.mxu0 0.0
    %53 = vmatpush.msra.mxu0 0.0
    %54 = vmatpush.msra.mxu0 %v25
    %55 = vmatmul.f32.gmra.mxu0 %v28
    %v56 = vpop.f32.mrf.mxu0
    %v57 = vadd.f32 0.0, %v56
    %58 = vmatmul.f32.gmra.mxu0 %v31
    %v59 = vpop.f32.mrf.mxu0
    %v60 = vadd.f32 0.0, %v59
    %61 = vmatmul.f32.gmra.mxu0 %v34
    %v62 = vpop.f32.mrf.mxu0
    %v63 = vadd.f32 0.0, %v62
    %64 = vmatmul.f32.gmra.mxu0 %v37
    %v65 = vpop.f32.mrf.mxu0
    %v66 = vadd.f32 0.0, %v65
    %67 = vdwg.mxu0
    %v68 = vld [vmem:[%s1] sm:$0xff]
    %v69 = vld [vmem:[%s1 + $0x8] sm:$0xff]
    %v70 = vld [vmem:[%s1 + $0x10] sm:$0xff]
    %v71 = vld [vmem:[%s1 + $0x18] sm:$0xff]
    %v72 = vld [vmem:[%s3] sm:$0x1]
    %74 = vset.pattern.permute.xlu0 0
    %75 = vperm.xlu0 %74, %v68
    %v76 = vpop.permute.xlu0 %75
    %79 = vset.pattern.permute.xlu0 0
    %80 = vperm.xlu0 %79, %v69
    %v81 = vpop.permute.xlu0 %80
    %84 = vset.pattern.permute.xlu0 0
    %85 = vperm.xlu0 %84, %v70
    %v86 = vpop.permute.xlu0 %85
    %89 = vset.pattern.permute.xlu0 0
    %90 = vperm.xlu0 %89, %v71
    %v91 = vpop.permute.xlu0 %90
    %v94 = vperm.slane %v72, 0
    %v96 = vadd.f32 %v76, %v94
    %v97 = vadd.f32 %v81, %v94
    %v98 = vadd.f32 %v86, %v94
    %v99 = vadd.f32 %v91, %v94
    %v100 = vmul.f32 %v57, 2.0
    %v101 = vmul.f32 %v60, 2.0
    %v102 = vmul.f32 %v63, 2.0
    %v103 = vmul.f32 %v66, 2.0
    %v104 = vsub.f32 %v96, %v100
    %v105 = vsub.f32 %v97, %v101
    %v106 = vsub.f32 %v98, %v102
    %v107 = vsub.f32 %v99, %v103
    %v108 = vmax.f32 %v104, 0.0
    %v109 = vmax.f32 %v105, 0.0
    %v110 = vmax.f32 %v106, 0.0
    %v111 = vmax.f32 %v107, 0.0
    %v112 = vsub.f32 0.0, %v108
    %v113 = vsub.f32 0.0, %v109
    %v114 = vsub.f32 0.0, %v110
    %v115 = vsub.f32 0.0, %v111
    %v116 = vld [vmem:[%s4] sm:$0x1]
    %v118 = vperm.slane %v116, 0
    %v120 = vmul.f32 %v112, %v118
    %v121 = vmul.f32 %v113, %v118
    %v122 = vmul.f32 %v114, %v118
    %v123 = vmul.f32 %v115, %v118
    %v124 = vmul.f32 %v120, 1.442695
    %v125 = vpow.pop %v124
    %v126 = vmul.f32 %v121, 1.442695
    %v127 = vpow.pop %v126
    %v128 = vmul.f32 %v122, 1.442695
    %v129 = vpow.pop %v128
    %v130 = vmul.f32 %v123, 1.442695
    %v131 = vpow.pop %v130
    %132 = vst [vmem:[#allocation2] sm:$0xff] %v125
    %133 = vst [vmem:[#allocation2 + $0x8] sm:$0xff] %v127
    %134 = vst [vmem:[#allocation2 + $0x10] sm:$0xff] %v129
    %135 = vst [vmem:[#allocation2 + $0x18] sm:$0xff] %v131
    // Predicated region
    $region22: #{tpu_custom_call.1} parent=1 // pred_check
      _
    $region23: #{tpu_custom_call.1} parent=1 // pred_check_branch
      %137 = sbr.rel (0) target = $region25
    $region24: #{tpu_custom_call.1} parent=1 // pred_region
      %139 = vsyncadd [#allocation3], 0
      %s140 = sshll.u32 [#allocation2], 4
      %s141 = int_to_ptr.vmem [resolvable:$true] %s140
      %s142 = sshll.u32 %s5, 4
      %s143 = int_to_ptr.hbm [resolvable:$true] %s142
      %148 = dma.vmem_to_hbm [thread:$0]  %s141, 512, %s143, [#allocation3], 128, 128, 8
    $region25: #{tpu_custom_call.1} parent=1 // pred_fallthru
      _
    // Predicated region
    $region26: #{tpu_custom_call.1} parent=1 // pred_check
      _
    $region27: #{tpu_custom_call.1} parent=1 // pred_check_branch
      %150 = sbr.rel (0) target = $region29
    $region28: #{tpu_custom_call.1} parent=1 // pred_region
      %152 = dma.done [#allocation3], 512
    $region29: #{tpu_custom_call.1} parent=1 // pred_fallthru
      _
    %153 = vsyncpa [#allocation3], 1

</llo_original>
